<compile_context>
chip_gen: v7x
topology: tpu7x:2x2x1
jax: 0.10.0
libtpu: 0.0.40
codegen_flags: <defaults>
</compile_context>

<pallas_src>
import functools

import jax
import jax.numpy as jnp
from jax.experimental import pallas as pl
from jax.experimental.pallas import tpu as pltpu

_LANE = 128   # vreg lane width
_SUBLANE = 8  # f32 sublane count


def _round_up(x, m):
    return (x + m - 1) // m * m


def _vmem_limit_bytes():
    """~3/4 of physical VMEM: ~96 MiB on v5e/v6e (128 MiB), ~48 MiB on v7x (64 MiB)."""
    try:
        cap = int(pltpu.get_tpu_info().vmem_capacity_bytes)
    except Exception:
        cap = 64 * 1024 * 1024  # conservative fallback, fits every generation
    return cap * 3 // 4


def _pick_batch_tile(n, itemsize, tm_max):
    """Balanced batch tiles, aligned to the dtype's packed sublane tile."""
    sub = max(_SUBLANE, 32 // itemsize)          # 8 for f32, 16 for bf16, 32 for int8
    num_tiles = pl.cdiv(n, max(tm_max, sub))
    tm = _round_up(pl.cdiv(n, num_tiles), sub)   # balanced: waste < sub rows per tile
    # v7x has 2 TensorCores: prefer >=2 batch tiles so the "parallel" grid axis can
    # shard across them (costs at most one ~0.35us extra step on single-TC chips).
    if pl.cdiv(n, tm) == 1 and n > sub:
        tm = _round_up(pl.cdiv(n, 2), sub)
    if tm > n:            # keep block dim <= array dim (block == full dim is legal)
        tm = n
    return tm


# ----------------------------- Pallas kernel -------------------------------

def _mlp_fused_kernel(*refs, num_layers, has_xj):
    """Fused MLP over one batch tile.

    refs = (x_ref, [xj_ref], w0_ref, b0_ref, ..., w{L-1}_ref, b{L-1}_ref, o_ref)
    Hidden dims are zero-padded to 128 (padded weight rows/cols and biases are
    zero, so padded lanes stay exactly 0 through every layer); the true Din /
    Dout are used unpadded.
    """
    if has_xj:
        x_ref, xj_ref = refs[0], refs[1]
        wb_refs = refs[2:-1]
        h = x_ref[...].astype(jnp.float32) * xj_ref[...].astype(jnp.float32)
    else:
        x_ref = refs[0]
        wb_refs = refs[1:-1]
        h = x_ref[...].astype(jnp.float32)
    o_ref = refs[-1]

    for layer in range(num_layers):
        w = wb_refs[2 * layer][...]          # (din_p, dout_p), compute dtype (f32/bf16)
        b = wb_refs[2 * layer + 1][...]      # (1, dout_p), f32
        # MXU matmul in the weights' dtype, f32 accumulation; bias + ReLU in f32 (VPU).
        h = jnp.dot(h.astype(w.dtype), w, preferred_element_type=jnp.float32)
        h = h + b
        if layer < num_layers - 1:
            h = jnp.maximum(h, 0.0)          # ReLU (dropout = identity, eval mode)
    o_ref[...] = h.astype(o_ref.dtype)


# ------------------------------ host wrappers --------------------------------

def prepare_mlp_params(params, compute_dtype=jnp.bfloat16):
    """Pad / cast Linear params ONCE, outside the per-call forward path.

    params: [(w_t, b), ...] with w_t of shape (din, dout) (already transposed).
    Interior hidden dims are zero-padded to multiples of 128 (lane-dense
    intermediates); the true in/out dims are kept exact so neither x nor the
    output needs HBM-side padding or slicing. Weights are cast to
    `compute_dtype` (bf16 halves weight HBM/VMEM traffic); biases stay f32.
    """
    dims = [params[0][0].shape[0]] + [w.shape[1] for w, _ in params]
    pdims = [dims[0]] + [_round_up(d, _LANE) for d in dims[1:-1]] + [dims[-1]]
    padded = []
    for i, (w_t, b) in enumerate(params):
        din_p, dout_p = pdims[i], pdims[i + 1]
        wp = jnp.pad(w_t.astype(compute_dtype),
                     ((0, din_p - w_t.shape[0]), (0, dout_p - w_t.shape[1])))
        bp = jnp.pad(b.astype(jnp.float32).reshape(1, -1),
                     ((0, 0), (0, dout_p - b.shape[0])))
        padded.append((wp, bp))
    return padded


def mlp_forward(padded_params, x, x_j=None, *, tm_max=1024):
    """Fused MLP forward.  `padded_params` comes from prepare_mlp_params()."""
    num_layers = len(padded_params)
    N, Din = x.shape
    assert Din == padded_params[0][0].shape[0]
    Dout = padded_params[-1][0].shape[1]
    has_xj = x_j is not None

    tm = _pick_batch_tile(N, x.dtype.itemsize, tm_max)
    num_tiles = pl.cdiv(N, tm)   # last tile may be partial; Pallas masks its store

    args = [x] + ([x_j] if has_xj else [])
    flops = 0
    bytes_accessed = N * Din * x.dtype.itemsize * (2 if has_xj else 1)
    for wp, bp in padded_params:
        args += [wp, bp]
        flops += 2 * N * wp.shape[0] * wp.shape[1]
        bytes_accessed += wp.size * wp.dtype.itemsize + bp.size * bp.dtype.itemsize
    bytes_accessed += N * Dout * x.dtype.itemsize  # output

    kernel = functools.partial(_mlp_fused_kernel,
                               num_layers=num_layers, has_xj=has_xj)

    def run(single_buffer_weights):
        # Weights/biases have a constant index_map -> single-buffer them so a
        # useless second copy doesn't eat VMEM (matters most on v7x's 64 MiB).
        wkw = {"pipeline_mode": pl.Buffered(1)} if single_buffer_weights else {}
        in_specs = [pl.BlockSpec((tm, Din), lambda i: (i, 0))]
        if has_xj:
            in_specs.append(pl.BlockSpec((tm, Din), lambda i: (i, 0)))
        for wp, bp in padded_params:
            in_specs.append(pl.BlockSpec(wp.shape, lambda i: (0, 0), **wkw))
            in_specs.append(pl.BlockSpec(bp.shape, lambda i: (0, 0), **wkw))
        out = pl.pallas_call(
            kernel,
            out_shape=jax.ShapeDtypeStruct((N, Dout), x.dtype),
            grid=(num_tiles,),
            in_specs=in_specs,
            out_specs=pl.BlockSpec((tm, Dout), lambda i: (i, 0)),
            compiler_params=pltpu.CompilerParams(
                dimension_semantics=("parallel",),   # shard batch tiles across TCs (v7x)
                vmem_limit_bytes=_vmem_limit_bytes(),
            ),
            cost_estimate=pl.CostEstimate(
                flops=flops, transcendentals=0, bytes_accessed=bytes_accessed),
        )(*args)
        return jax.block_until_ready(out)

    try:
        return run(True)
    except Exception:
        # Fallback if this JAX build rejects single-buffered (Buffered(1)) blocks.
        return run(False)


def init_mlp_params(key, in_channels, hidden_channels, out_channels, num_layers):
    """Deterministic Linear params; weights stored pre-transposed as (din, dout)."""
    dims = [in_channels] + [hidden_channels] * (num_layers - 1) + [out_channels]
    params = []
    for i in range(num_layers):
        key, kw, kb = jax.random.split(key, 3)
        din, dout = dims[i], dims[i + 1]
        bound = 1.0 / (din ** 0.5)  # PyTorch Linear default init range
        w_t = jax.random.uniform(kw, (din, dout), jnp.float32, -bound, bound)
        b = jax.random.uniform(kb, (dout,), jnp.float32, -bound, bound)
        params.append((w_t, b))
    return params


def mlp_reference(params, x, x_j=None, compute_dtype=jnp.float32):
    """Pure-JAX reference mirroring MLP.forward in eval mode."""
    h = x if x_j is None else x * x_j
    for i, (w_t, b) in enumerate(params):
        y = jnp.dot(h.astype(compute_dtype), w_t.astype(compute_dtype),
                    preferred_element_type=jnp.float32) + b
        h = jnp.maximum(y, 0.0) if i < len(params) - 1 else y
    return h


# ---------------------------------- main ------------------------------------

if __name__ == "__main__":
    # TODO(synk): dropout implemented as the eval-mode identity; training-mode
    # dropout would draw pltpu.prng_random_bits inside the fused kernel. The
    # module's BatchNorm1d layers are never used in forward(), so they are omitted.
    in_channels, hidden_channels, out_channels = 16, 32, 8
    num_layers, dropout = 3, 0.5
    batch = 8

    key = jax.random.PRNGKey(0)
    kx, kxj, kp = jax.random.split(key, 3)
    x = jax.random.normal(kx, (batch, in_channels), jnp.float32)
    x_j = jax.random.normal(kxj, (batch, in_channels), jnp.float32)
    params = init_mlp_params(kp, in_channels, hidden_channels, out_channels,
                             num_layers)

    # bf16-weight fast path (default perf recommendation): compare against a
    # reference that uses the same bf16 matmul / f32 accumulation recipe.
    prep_bf16 = prepare_mlp_params(params, compute_dtype=jnp.bfloat16)
    out_bf16 = mlp_forward(prep_bf16, x, x_j)
    ref_bf16 = mlp_reference(params, x, x_j, compute_dtype=jnp.bfloat16)
    assert out_bf16.shape == (batch, out_channels)
    assert jnp.allclose(out_bf16, ref_bf16, atol=1e-3, rtol=1e-3)

    # f32 path: matches the PyTorch module's numerics tightly, with and without x_j.
    prep_f32 = prepare_mlp_params(params, compute_dtype=jnp.float32)
    out_f32 = mlp_forward(prep_f32, x, x_j)
    assert jnp.allclose(out_f32, mlp_reference(params, x, x_j), atol=1e-5, rtol=1e-5)

    out_f32_noxj = mlp_forward(prep_f32, x)
    assert out_f32_noxj.shape == (batch, out_channels)
    assert jnp.allclose(out_f32_noxj, mlp_reference(params, x), atol=1e-5, rtol=1e-5)

    print("KERNEL_OK")
</pallas_src>

<mosaic_0001>
module attributes {stable_mosaic.version = 11 : i64} {
  func.func @_mlp_fused_kernel(%arg0: i32, %arg1: memref<8x16xf32, #tpu.memory_space<vmem>>, %arg2: memref<8x16xf32, #tpu.memory_space<vmem>>, %arg3: memref<16x128xbf16, #tpu.memory_space<vmem>>, %arg4: memref<1x128xf32, #tpu.memory_space<vmem>>, %arg5: memref<128x128xbf16, #tpu.memory_space<vmem>>, %arg6: memref<1x128xf32, #tpu.memory_space<vmem>>, %arg7: memref<128x8xbf16, #tpu.memory_space<vmem>>, %arg8: memref<1x8xf32, #tpu.memory_space<vmem>>, %arg9: memref<8x8xf32, #tpu.memory_space<vmem>>) attributes {dimension_semantics = [#tpu.dimension_semantics<parallel>], iteration_bounds = array<i64: 1>, scalar_prefetch = 0 : i64, scratch_operands = 0 : i64, tpu.core_type = #tpu.core_type<tc>, window_params = [{transform_indices = @transform_0, window_bounds = array<i64: 8, 16>}, {transform_indices = @transform_1, window_bounds = array<i64: 8, 16>}, {pipeline_mode = #tpu.pipeline_mode<synchronous>, transform_indices = @transform_2, window_bounds = array<i64: 16, 128>}, {pipeline_mode = #tpu.pipeline_mode<synchronous>, transform_indices = @transform_3, window_bounds = array<i64: 1, 128>}, {pipeline_mode = #tpu.pipeline_mode<synchronous>, transform_indices = @transform_4, window_bounds = array<i64: 128, 128>}, {pipeline_mode = #tpu.pipeline_mode<synchronous>, transform_indices = @transform_5, window_bounds = array<i64: 1, 128>}, {pipeline_mode = #tpu.pipeline_mode<synchronous>, transform_indices = @transform_6, window_bounds = array<i64: 128, 8>}, {pipeline_mode = #tpu.pipeline_mode<synchronous>, transform_indices = @transform_7, window_bounds = array<i64: 1, 8>}, {transform_indices = @transform_8, window_bounds = array<i64: 8, 8>}]} {
    %c0 = arith.constant 0 : index
    %c0_0 = arith.constant 0 : index
    %0 = vector.load %arg1[%c0, %c0_0] : memref<8x16xf32, #tpu.memory_space<vmem>>, vector<8x16xf32>
    %c0_1 = arith.constant 0 : index
    %c0_2 = arith.constant 0 : index
    %1 = vector.load %arg2[%c0_1, %c0_2] : memref<8x16xf32, #tpu.memory_space<vmem>>, vector<8x16xf32>
    %2 = arith.mulf %0, %1 : vector<8x16xf32>
    %c0_3 = arith.constant 0 : index
    %c0_4 = arith.constant 0 : index
    %3 = vector.load %arg3[%c0_3, %c0_4] : memref<16x128xbf16, #tpu.memory_space<vmem>>, vector<16x128xbf16>
    %c0_5 = arith.constant 0 : index
    %c0_6 = arith.constant 0 : index
    %4 = vector.load %arg4[%c0_5, %c0_6] : memref<1x128xf32, #tpu.memory_space<vmem>>, vector<1x128xf32>
    %5 = arith.truncf %2 : vector<8x16xf32> to vector<8x16xbf16>
    %cst = arith.constant dense<0.000000e+00> : vector<8x128xf32>
    %6 = tpu.matmul %5, %3, %cst {dimension_numbers = #tpu.dot_dimension_numbers<[1], [0], [0], [1], [0, 0, 1, 1], [], []>} : vector<8x16xbf16>, vector<16x128xbf16>, vector<8x128xf32> -> vector<8x128xf32>
    %7 = vector.broadcast %4 : vector<1x128xf32> to vector<8x128xf32>
    %8 = arith.addf %6, %7 : vector<8x128xf32>
    %cst_7 = arith.constant 0.000000e+00 : f32
    %9 = vector.broadcast %cst_7 : f32 to vector<8x128xf32>
    %10 = arith.maximumf %8, %9 : vector<8x128xf32>
    %c0_8 = arith.constant 0 : index
    %c0_9 = arith.constant 0 : index
    %11 = vector.load %arg5[%c0_8, %c0_9] : memref<128x128xbf16, #tpu.memory_space<vmem>>, vector<128x128xbf16>
    %c0_10 = arith.constant 0 : index
    %c0_11 = arith.constant 0 : index
    %12 = vector.load %arg6[%c0_10, %c0_11] : memref<1x128xf32, #tpu.memory_space<vmem>>, vector<1x128xf32>
    %13 = arith.truncf %10 : vector<8x128xf32> to vector<8x128xbf16>
    %cst_12 = arith.constant dense<0.000000e+00> : vector<8x128xf32>
    %14 = tpu.matmul %13, %11, %cst_12 {dimension_numbers = #tpu.dot_dimension_numbers<[1], [0], [0], [1], [0, 0, 1, 1], [], []>} : vector<8x128xbf16>, vector<128x128xbf16>, vector<8x128xf32> -> vector<8x128xf32>
    %15 = vector.broadcast %12 : vector<1x128xf32> to vector<8x128xf32>
    %16 = arith.addf %14, %15 : vector<8x128xf32>
    %cst_13 = arith.constant 0.000000e+00 : f32
    %17 = vector.broadcast %cst_13 : f32 to vector<8x128xf32>
    %18 = arith.maximumf %16, %17 : vector<8x128xf32>
    %c0_14 = arith.constant 0 : index
    %c0_15 = arith.constant 0 : index
    %19 = vector.load %arg7[%c0_14, %c0_15] : memref<128x8xbf16, #tpu.memory_space<vmem>>, vector<128x8xbf16>
    %c0_16 = arith.constant 0 : index
    %c0_17 = arith.constant 0 : index
    %20 = vector.load %arg8[%c0_16, %c0_17] : memref<1x8xf32, #tpu.memory_space<vmem>>, vector<1x8xf32>
    %21 = arith.truncf %18 : vector<8x128xf32> to vector<8x128xbf16>
    %cst_18 = arith.constant dense<0.000000e+00> : vector<8x8xf32>
    %22 = tpu.matmul %21, %19, %cst_18 {dimension_numbers = #tpu.dot_dimension_numbers<[1], [0], [0], [1], [0, 0, 1, 1], [], []>} : vector<8x128xbf16>, vector<128x8xbf16>, vector<8x8xf32> -> vector<8x8xf32>
    %23 = vector.broadcast %20 : vector<1x8xf32> to vector<8x8xf32>
    %24 = arith.addf %22, %23 : vector<8x8xf32>
    %c0_19 = arith.constant 0 : index
    %c0_20 = arith.constant 0 : index
    %25 = vector.load %arg9[%c0_19, %c0_20] : memref<8x8xf32, #tpu.memory_space<vmem>>, vector<8x8xf32>
    tpu.vector_store %arg9[%c0_19, %c0_20], %24 {strides = array<i32>} : memref<8x8xf32, #tpu.memory_space<vmem>>, vector<8x8xf32>,
    return
  }
  func.func @transform_0(%arg0: i32) -> (i32, i32) {
    %c0_i32 = arith.constant 0 : i32
    %c0_i32_0 = arith.constant 0 : i32
    return %arg0, %c0_i32 : i32, i32
  }
  func.func @transform_1(%arg0: i32) -> (i32, i32) {
    %c0_i32 = arith.constant 0 : i32
    %c0_i32_0 = arith.constant 0 : i32
    return %arg0, %c0_i32 : i32, i32
  }
  func.func @transform_2(%arg0: i32) -> (i32, i32) {
    %c0_i32 = arith.constant 0 : i32
    %c0_i32_0 = arith.constant 0 : i32
    %c0_i32_1 = arith.constant 0 : i32
    return %c0_i32, %c0_i32_0 : i32, i32
  }
  func.func @transform_3(%arg0: i32) -> (i32, i32) {
    %c0_i32 = arith.constant 0 : i32
    %c0_i32_0 = arith.constant 0 : i32
    %c0_i32_1 = arith.constant 0 : i32
    return %c0_i32, %c0_i32_0 : i32, i32
  }
  func.func @transform_4(%arg0: i32) -> (i32, i32) {
    %c0_i32 = arith.constant 0 : i32
    %c0_i32_0 = arith.constant 0 : i32
    %c0_i32_1 = arith.constant 0 : i32
    return %c0_i32, %c0_i32_0 : i32, i32
  }
  func.func @transform_5(%arg0: i32) -> (i32, i32) {
    %c0_i32 = arith.constant 0 : i32
    %c0_i32_0 = arith.constant 0 : i32
    %c0_i32_1 = arith.constant 0 : i32
    return %c0_i32, %c0_i32_0 : i32, i32
  }
  func.func @transform_6(%arg0: i32) -> (i32, i32) {
    %c0_i32 = arith.constant 0 : i32
    %c0_i32_0 = arith.constant 0 : i32
    %c0_i32_1 = arith.constant 0 : i32
    return %c0_i32, %c0_i32_0 : i32, i32
  }
  func.func @transform_7(%arg0: i32) -> (i32, i32) {
    %c0_i32 = arith.constant 0 : i32
    %c0_i32_0 = arith.constant 0 : i32
    %c0_i32_1 = arith.constant 0 : i32
    return %c0_i32, %c0_i32_0 : i32, i32
  }
  func.func @transform_8(%arg0: i32) -> (i32, i32) {
    %c0_i32 = arith.constant 0 : i32
    %c0_i32_0 = arith.constant 0 : i32
    return %arg0, %c0_i32 : i32, i32
  }
}

module attributes {stable_mosaic.version = 11 : i64} {
  func.func @_mlp_fused_kernel(%arg0: i32, %arg1: memref<8x16xf32, #tpu.memory_space<vmem>>, %arg2: memref<8x16xf32, #tpu.memory_space<vmem>>, %arg3: memref<16x128xbf16, #tpu.memory_space<vmem>>, %arg4: memref<1x128xf32, #tpu.memory_space<vmem>>, %arg5: memref<128x128xbf16, #tpu.memory_space<vmem>>, %arg6: memref<1x128xf32, #tpu.memory_space<vmem>>, %arg7: memref<128x8xbf16, #tpu.memory_space<vmem>>, %arg8: memref<1x8xf32, #tpu.memory_space<vmem>>, %arg9: memref<8x8xf32, #tpu.memory_space<vmem>>) attributes {dimension_semantics = [#tpu.dimension_semantics<parallel>], iteration_bounds = array<i64: 1>, scalar_prefetch = 0 : i64, scratch_operands = 0 : i64, tpu.core_type = #tpu.core_type<tc>, window_params = [{transform_indices = @transform_0, window_bounds = array<i64: 8, 16>}, {transform_indices = @transform_1, window_bounds = array<i64: 8, 16>}, {pipeline_mode = #tpu.pipeline_mode<synchronous>, transform_indices = @transform_2, window_bounds = array<i64: 16, 128>}, {pipeline_mode = #tpu.pipeline_mode<synchronous>, transform_indices = @transform_3, window_bounds = array<i64: 1, 128>}, {pipeline_mode = #tpu.pipeline_mode<synchronous>, transform_indices = @transform_4, window_bounds = array<i64: 128, 128>}, {pipeline_mode = #tpu.pipeline_mode<synchronous>, transform_indices = @transform_5, window_bounds = array<i64: 1, 128>}, {pipeline_mode = #tpu.pipeline_mode<synchronous>, transform_indices = @transform_6, window_bounds = array<i64: 128, 8>}, {pipeline_mode = #tpu.pipeline_mode<synchronous>, transform_indices = @transform_7, window_bounds = array<i64: 1, 8>}, {transform_indices = @transform_8, window_bounds = array<i64: 8, 8>}]} {
    %c0 = arith.constant 0 : index
    %c0_0 = arith.constant 0 : index
    %0 = vector.load %arg1[%c0, %c0_0] : memref<8x16xf32, #tpu.memory_space<vmem>>, vector<8x16xf32>
    %c0_1 = arith.constant 0 : index
    %c0_2 = arith.constant 0 : index
    %1 = vector.load %arg2[%c0_1, %c0_2] : memref<8x16xf32, #tpu.memory_space<vmem>>, vector<8x16xf32>
    %2 = arith.mulf %0, %1 : vector<8x16xf32>
    %c0_3 = arith.constant 0 : index
    %c0_4 = arith.constant 0 : index
    %3 = vector.load %arg3[%c0_3, %c0_4] : memref<16x128xbf16, #tpu.memory_space<vmem>>, vector<16x128xbf16>
    %c0_5 = arith.constant 0 : index
    %c0_6 = arith.constant 0 : index
    %4 = vector.load %arg4[%c0_5, %c0_6] : memref<1x128xf32, #tpu.memory_space<vmem>>, vector<1x128xf32>
    %5 = arith.truncf %2 : vector<8x16xf32> to vector<8x16xbf16>
    %cst = arith.constant dense<0.000000e+00> : vector<8x128xf32>
    %6 = tpu.matmul %5, %3, %cst {dimension_numbers = #tpu.dot_dimension_numbers<[1], [0], [0], [1], [0, 0, 1, 1], [], []>} : vector<8x16xbf16>, vector<16x128xbf16>, vector<8x128xf32> -> vector<8x128xf32>
    %7 = vector.broadcast %4 : vector<1x128xf32> to vector<8x128xf32>
    %8 = arith.addf %6, %7 : vector<8x128xf32>
    %cst_7 = arith.constant 0.000000e+00 : f32
    %9 = vector.broadcast %cst_7 : f32 to vector<8x128xf32>
    %10 = arith.maximumf %8, %9 : vector<8x128xf32>
    %c0_8 = arith.constant 0 : index
    %c0_9 = arith.constant 0 : index
    %11 = vector.load %arg5[%c0_8, %c0_9] : memref<128x128xbf16, #tpu.memory_space<vmem>>, vector<128x128xbf16>
    %c0_10 = arith.constant 0 : index
    %c0_11 = arith.constant 0 : index
    %12 = vector.load %arg6[%c0_10, %c0_11] : memref<1x128xf32, #tpu.memory_space<vmem>>, vector<1x128xf32>
    %13 = arith.truncf %10 : vector<8x128xf32> to vector<8x128xbf16>
    %cst_12 = arith.constant dense<0.000000e+00> : vector<8x128xf32>
    %14 = tpu.matmul %13, %11, %cst_12 {dimension_numbers = #tpu.dot_dimension_numbers<[1], [0], [0], [1], [0, 0, 1, 1], [], []>} : vector<8x128xbf16>, vector<128x128xbf16>, vector<8x128xf32> -> vector<8x128xf32>
    %15 = vector.broadcast %12 : vector<1x128xf32> to vector<8x128xf32>
    %16 = arith.addf %14, %15 : vector<8x128xf32>
    %cst_13 = arith.constant 0.000000e+00 : f32
    %17 = vector.broadcast %cst_13 : f32 to vector<8x128xf32>
    %18 = arith.maximumf %16, %17 : vector<8x128xf32>
    %c0_14 = arith.constant 0 : index
    %c0_15 = arith.constant 0 : index
    %19 = vector.load %arg7[%c0_14, %c0_15] : memref<128x8xbf16, #tpu.memory_space<vmem>>, vector<128x8xbf16>
    %c0_16 = arith.constant 0 : index
    %c0_17 = arith.constant 0 : index
    %20 = vector.load %arg8[%c0_16, %c0_17] : memref<1x8xf32, #tpu.memory_space<vmem>>, vector<1x8xf32>
    %21 = arith.truncf %18 : vector<8x128xf32> to vector<8x128xbf16>
    %cst_18 = arith.constant dense<0.000000e+00> : vector<8x8xf32>
    %22 = tpu.matmul %21, %19, %cst_18 {dimension_numbers = #tpu.dot_dimension_numbers<[1], [0], [0], [1], [0, 0, 1, 1], [], []>} : vector<8x128xbf16>, vector<128x8xbf16>, vector<8x8xf32> -> vector<8x8xf32>
    %23 = vector.broadcast %20 : vector<1x8xf32> to vector<8x8xf32>
    %24 = arith.addf %22, %23 : vector<8x8xf32>
    %c0_19 = arith.constant 0 : index
    %c0_20 = arith.constant 0 : index
    %25 = vector.load %arg9[%c0_19, %c0_20] : memref<8x8xf32, #tpu.memory_space<vmem>>, vector<8x8xf32>
    tpu.vector_store %arg9[%c0_19, %c0_20], %24 {strides = array<i32>} : memref<8x8xf32, #tpu.memory_space<vmem>>, vector<8x8xf32>,
    return
  }
  func.func @transform_0(%arg0: i32) -> (i32, i32) {
    %c0_i32 = arith.constant 0 : i32
    %c0_i32_0 = arith.constant 0 : i32
    return %arg0, %c0_i32 : i32, i32
  }
  func.func @transform_1(%arg0: i32) -> (i32, i32) {
    %c0_i32 = arith.constant 0 : i32
    %c0_i32_0 = arith.constant 0 : i32
    return %arg0, %c0_i32 : i32, i32
  }
  func.func @transform_2(%arg0: i32) -> (i32, i32) {
    %c0_i32 = arith.constant 0 : i32
    %c0_i32_0 = arith.constant 0 : i32
    %c0_i32_1 = arith.constant 0 : i32
    return %c0_i32, %c0_i32_0 : i32, i32
  }
  func.func @transform_3(%arg0: i32) -> (i32, i32) {
    %c0_i32 = arith.constant 0 : i32
    %c0_i32_0 = arith.constant 0 : i32
    %c0_i32_1 = arith.constant 0 : i32
    return %c0_i32, %c0_i32_0 : i32, i32
  }
  func.func @transform_4(%arg0: i32) -> (i32, i32) {
    %c0_i32 = arith.constant 0 : i32
    %c0_i32_0 = arith.constant 0 : i32
    %c0_i32_1 = arith.constant 0 : i32
    return %c0_i32, %c0_i32_0 : i32, i32
  }
  func.func @transform_5(%arg0: i32) -> (i32, i32) {
    %c0_i32 = arith.constant 0 : i32
    %c0_i32_0 = arith.constant 0 : i32
    %c0_i32_1 = arith.constant 0 : i32
    return %c0_i32, %c0_i32_0 : i32, i32
  }
  func.func @transform_6(%arg0: i32) -> (i32, i32) {
    %c0_i32 = arith.constant 0 : i32
    %c0_i32_0 = arith.constant 0 : i32
    %c0_i32_1 = arith.constant 0 : i32
    return %c0_i32, %c0_i32_0 : i32, i32
  }
  func.func @transform_7(%arg0: i32) -> (i32, i32) {
    %c0_i32 = arith.constant 0 : i32
    %c0_i32_0 = arith.constant 0 : i32
    %c0_i32_1 = arith.constant 0 : i32
    return %c0_i32, %c0_i32_0 : i32, i32
  }
  func.func @transform_8(%arg0: i32) -> (i32, i32) {
    %c0_i32 = arith.constant 0 : i32
    %c0_i32_0 = arith.constant 0 : i32
    return %arg0, %c0_i32 : i32, i32
  }
}

</mosaic_0001>

<llo_original>
// kernel: tpu_custom_call.1
$region0: #{tpu_custom_call.1}
  #allocation0 [shape = 'u32[]', space=smem, size = 0x4, offset = 0x4, fixed_abs, tag = 'smem constant byte address 0x4 - core index']
  #allocation1 [shape = 'u32[144,128]{1,0:T(1,128)}', space=vmem, size = 0x12000, scoped, tag = 'internal scratch']
  %s0 = inlined_call_operand.vmem [shape: f32[8,16], index: 0, kind: input, shape index: {}]
  %s1 = inlined_call_operand.vmem [shape: f32[8,16], index: 1, kind: input, shape index: {}]
  %s2 = inlined_call_operand.hbm [shape: bf16[16,128], index: 2, kind: input, shape index: {}]
  %s3 = inlined_call_operand.vmem [shape: f32[1,128], index: 3, kind: input, shape index: {}]
  %s4 = inlined_call_operand.vmem [shape: bf16[128,128], index: 4, kind: input, shape index: {}]
  %s5 = inlined_call_operand.vmem [shape: f32[1,128], index: 5, kind: input, shape index: {}]
  %s6 = inlined_call_operand.vmem [shape: bf16[128,8], index: 6, kind: input, shape index: {}]
  %s7 = inlined_call_operand.vmem [shape: f32[1,8], index: 7, kind: input, shape index: {}]
  %s8 = inlined_call_operand.hbm [shape: f32[8,8], index: 8, kind: output, shape index: {}]
  %s9 = sld [smem:[#allocation0]]
  $region46: #{tpu_custom_call.1} parent=0
    _
  %s11 = ssub.s32 1, %s9
  %s12 = scalar_select 0, %s11, %s9
  $region1: #{tpu_custom_call.1} parent=0
    #allocation2 [shape = 'u8[4096]{0}', space=vmem, size = 0x1000, scoped, tag = 'input window, operand 2, single buffered']
    #allocation3 [shape = 's32[1]{0}', space=sflag, size = 0x4, scoped, tag = 'scoped memory for tpu_custom_call.1']
    #allocation4 [shape = 's32[1]{0}', space=sflag, size = 0x4, scoped, tag = 'scoped memory for tpu_custom_call.1']
    #allocation5 [shape = 'u8[4096]{0}', space=vmem, size = 0x1000, scoped, tag = 'output window, operand 0, single buffered']
    %13 = vsyncpa [#allocation3], 0
    %14 = vsyncpa [#allocation4], 0
    // Predicated region
    $region2: #{tpu_custom_call.1} parent=1 // pred_check
      _
    $region3: #{tpu_custom_call.1} parent=1 // pred_check_branch
      %16 = sbr.rel (0) target = $region5
    $region4: #{tpu_custom_call.1} parent=1 // pred_region
      _
    $region5: #{tpu_custom_call.1} parent=1 // pred_fallthru
      _
    // Predicated region
    $region6: #{tpu_custom_call.1} parent=1 // pred_check
      _
    $region7: #{tpu_custom_call.1} parent=1 // pred_check_branch
      %18 = sbr.rel (0) target = $region9
    $region8: #{tpu_custom_call.1} parent=1 // pred_region
      _
    $region9: #{tpu_custom_call.1} parent=1 // pred_fallthru
      _
    // Predicated region
    $region10: #{tpu_custom_call.1} parent=1 // pred_check
      _
    $region11: #{tpu_custom_call.1} parent=1 // pred_check_branch
      %20 = sbr.rel (0) target = $region13
    $region12: #{tpu_custom_call.1} parent=1 // pred_region
      %s22 = ssub.s32 128, 128
      %23 = vsyncadd [#allocation3], %s22
      %s24 = sshll.u32 [#allocation2], 4
      %s25 = int_to_ptr.vmem [resolvable:$true] %s24
      %30 = dma.hbm_to_vmem [thread:$0]  %s2, 128, %s25, [#allocation3], 64, 64, 4
    $region13: #{tpu_custom_call.1} parent=1 // pred_fallthru
      _
    // Predicated region
    $region14: #{tpu_custom_call.1} parent=1 // pred_check
      _
    $region15: #{tpu_custom_call.1} parent=1 // pred_check_branch
      %32 = sbr.rel (0) target = $region17
    $region16: #{tpu_custom_call.1} parent=1 // pred_region
      _
    $region17: #{tpu_custom_call.1} parent=1 // pred_fallthru
      _
    // Predicated region
    $region18: #{tpu_custom_call.1} parent=1 // pred_check
      _
    $region19: #{tpu_custom_call.1} parent=1 // pred_check_branch
      %34 = sbr.rel (0) target = $region21
    $region20: #{tpu_custom_call.1} parent=1 // pred_region
      _
    $region21: #{tpu_custom_call.1} parent=1 // pred_fallthru
      _
    // Predicated region
    $region22: #{tpu_custom_call.1} parent=1 // pred_check
      _
    $region23: #{tpu_custom_call.1} parent=1 // pred_check_branch
      %36 = sbr.rel (0) target = $region25
    $region24: #{tpu_custom_call.1} parent=1 // pred_region
      _
    $region25: #{tpu_custom_call.1} parent=1 // pred_fallthru
      _
    // Predicated region
    $region26: #{tpu_custom_call.1} parent=1 // pred_check
      _
    $region27: #{tpu_custom_call.1} parent=1 // pred_check_branch
      %38 = sbr.rel (0) target = $region29
    $region28: #{tpu_custom_call.1} parent=1 // pred_region
      _
    $region29: #{tpu_custom_call.1} parent=1 // pred_fallthru
      _
    // Predicated region
    $region30: #{tpu_custom_call.1} parent=1 // pred_check
      _
    $region31: #{tpu_custom_call.1} parent=1 // pred_check_branch
      %40 = sbr.rel (0) target = $region33
    $region32: #{tpu_custom_call.1} parent=1 // pred_region
      _
    $region33: #{tpu_custom_call.1} parent=1 // pred_fallthru
      _
    // Predicated region
    $region34: #{tpu_custom_call.1} parent=1 // pred_check
      _
    $region35: #{tpu_custom_call.1} parent=1 // pred_check_branch
      %42 = sbr.rel (0) target = $region37
    $region36: #{tpu_custom_call.1} parent=1 // pred_region
      %43 = dma.done [#allocation3], 128
    $region37: #{tpu_custom_call.1} parent=1 // pred_fallthru
      _
    %v45 = vld [vmem:[%s0] sm:$0xff]
    %v46 = vld [vmem:[%s1] sm:$0xff]
    %v47 = vmul.f32 %v45, %v46
    %v48 = vld [vmem:[#allocation2] sm:$0xf]
    %v49 = vld [vmem:[#allocation2 + $0x4] sm:$0xf]
    %v50 = vld [vmem:[%s3] sm:$0x1]
    %v51 = vpack.c.bf16 %v47, %v47
    %v53 = vlaneseq
    %v54 = vshrl.u32 %v53, 7
    %v55 = vsub.s32 0, %v54
    %v56 = vrot.slane %v50, %v55
    %v60 = vunpack.c.l.b16 %v48
    %v61 = vunpack.c.l.b16 %v49
    %v62 = vpack.c.b16 %v61, %v60
    %vm64 = vcmask 130048
    %v66 = vsel %vm64, %v51, 0
    %68 = vmatprep.subr.bf16.mxu0 0
    %69 = vmatpush1.bf16.msra.mxu0 %v62
    %70 = vmatprep.subr.bf16.mxu0 0
    %71 = vmatpush1.bf16.msra.mxu0 0
    %72 = vmatprep.subr.bf16.mxu0 0
    %73 = vmatpush1.bf16.msra.mxu0 0
    %74 = vmatprep.subr.bf16.mxu0 0
    %75 = vmatpush1.bf16.msra.mxu0 0
    %76 = vmatprep.subr.bf16.mxu0 0
    %77 = vmatpush1.bf16.msra.mxu0 0
    %78 = vmatprep.subr.bf16.mxu0 0
    %79 = vmatpush1.bf16.msra.mxu0 0
    %80 = vmatprep.subr.bf16.mxu0 0
    %81 = vmatpush1.bf16.msra.mxu0 0
    %82 = vmatprep.subr.bf16.mxu0 0
    %83 = vmatpush1.bf16.msra.mxu0 0
    %84 = vmatprep.subr.bf16.mxu0 0
    %85 = vmatpush1.bf16.msra.mxu0 0
    %86 = vmatprep.subr.bf16.mxu0 0
    %87 = vmatpush1.bf16.msra.mxu0 0
    %88 = vmatprep.subr.bf16.mxu0 0
    %89 = vmatpush1.bf16.msra.mxu0 0
    %90 = vmatprep.subr.bf16.mxu0 0
    %91 = vmatpush1.bf16.msra.mxu0 0
    %92 = vmatprep.subr.bf16.mxu0 0
    %93 = vmatpush1.bf16.msra.mxu0 0
    %94 = vmatprep.subr.bf16.mxu0 0
    %95 = vmatpush1.bf16.msra.mxu0 0
    %96 = vmatprep.subr.bf16.mxu0 0
    %97 = vmatpush1.bf16.msra.mxu0 0
    %98 = vmatprep.subr.bf16.mxu0 0
    %99 = vmatpush1.bf16.msra.mxu0 0
    %100 = vmatprep.mubr.bf16.mxu0 0
    %101 = vmatmul.mubr.bf16.gmra.mrb[0].mxu0 %v66
    %v102 = vpop.f32.mrb[0].mxu0
    %v103 = vadd.f32 %v56, %v102
    %v104 = vpop.f32.mrb[0].mxu0
    %v105 = vpop.f32.mrb[0].mxu0
    %v106 = vpop.f32.mrb[0].mxu0
    %107 = vdwg.mxu0
    %v108 = vmax.f32 %v103, 0.0
    %v109 = vld [vmem:[%s4] sm:$0xf]
    %v110 = vld [vmem:[%s4 + $0x4] sm:$0xf]
    %v111 = vld [vmem:[%s4 + $0x8] sm:$0xf]
    %v112 = vld [vmem:[%s4 + $0xc] sm:$0xf]
    %v113 = vld [vmem:[%s4 + $0x10] sm:$0xf]
    %v114 = vld [vmem:[%s4 + $0x14] sm:$0xf]
    %v115 = vld [vmem:[%s4 + $0x18] sm:$0xf]
    %v116 = vld [vmem:[%s4 + $0x1c] sm:$0xf]
    %v117 = vld [vmem:[%s4 + $0x20] sm:$0xf]
    %v118 = vld [vmem:[%s4 + $0x24] sm:$0xf]
    %v119 = vld [vmem:[%s4 + $0x28] sm:$0xf]
    %v120 = vld [vmem:[%s4 + $0x2c] sm:$0xf]
    %v121 = vld [vmem:[%s4 + $0x30] sm:$0xf]
    %v122 = vld [vmem:[%s4 + $0x34] sm:$0xf]
    %v123 = vld [vmem:[%s4 + $0x38] sm:$0xf]
    %v124 = vld [vmem:[%s4 + $0x3c] sm:$0xf]
    %v125 = vld [vmem:[%s5] sm:$0x1]
    %v126 = vpack.c.bf16 %v108, %v108
    %v128 = vlaneseq
    %v129 = vshrl.u32 %v128, 7
    %v130 = vsub.s32 0, %v129
    %v131 = vrot.slane %v125, %v130
    %v149 = vunpack.c.l.b16 %v109
    %v150 = vunpack.c.l.b16 %v110
    %v151 = vunpack.c.l.b16 %v111
    %v152 = vunpack.c.l.b16 %v112
    %v153 = vunpack.c.l.b16 %v113
    %v154 = vunpack.c.l.b16 %v114
    %v155 = vunpack.c.l.b16 %v115
    %v156 = vunpack.c.l.b16 %v116
    %v157 = vunpack.c.l.b16 %v117
    %v158 = vunpack.c.l.b16 %v118
    %v159 = vunpack.c.l.b16 %v119
    %v160 = vunpack.c.l.b16 %v120
    %v161 = vunpack.c.l.b16 %v121
    %v162 = vunpack.c.l.b16 %v122
    %v163 = vunpack.c.l.b16 %v123
    %v164 = vunpack.c.l.b16 %v124
    %v165 = vpack.c.b16 %v150, %v149
    %v166 = vpack.c.b16 %v152, %v151
    %v167 = vpack.c.b16 %v154, %v153
    %v168 = vpack.c.b16 %v156, %v155
    %v169 = vpack.c.b16 %v158, %v157
    %v170 = vpack.c.b16 %v160, %v159
    %v171 = vpack.c.b16 %v162, %v161
    %v172 = vpack.c.b16 %v164, %v163
    %181 = vmatprep.subr.bf16.mxu0 0
    %182 = vmatpush1.bf16.msra.mxu0 %v165
    %183 = vmatprep.subr.bf16.mxu0 0
    %184 = vmatpush1.bf16.msra.mxu0 %v166
    %185 = vmatprep.subr.bf16.mxu0 0
    %186 = vmatpush1.bf16.msra.mxu0 %v167
    %187 = vmatprep.subr.bf16.mxu0 0
    %188 = vmatpush1.bf16.msra.mxu0 %v168
    %189 = vmatprep.subr.bf16.mxu0 0
    %190 = vmatpush1.bf16.msra.mxu0 %v169
    %191 = vmatprep.subr.bf16.mxu0 0
    %192 = vmatpush1.bf16.msra.mxu0 %v170
    %193 = vmatprep.subr.bf16.mxu0 0
    %194 = vmatpush1.bf16.msra.mxu0 %v171
    %195 = vmatprep.subr.bf16.mxu0 0
    %196 = vmatpush1.bf16.msra.mxu0 %v172
    %197 = vmatprep.subr.bf16.mxu0 0
    %198 = vmatpush1.bf16.msra.mxu0 0
    %199 = vmatprep.subr.bf16.mxu0 0
    %200 = vmatpush1.bf16.msra.mxu0 0
    %201 = vmatprep.subr.bf16.mxu0 0
    %202 = vmatpush1.bf16.msra.mxu0 0
    %203 = vmatprep.subr.bf16.mxu0 0
    %204 = vmatpush1.bf16.msra.mxu0 0
    %205 = vmatprep.subr.bf16.mxu0 0
    %206 = vmatpush1.bf16.msra.mxu0 0
    %207 = vmatprep.subr.bf16.mxu0 0
    %208 = vmatpush1.bf16.msra.mxu0 0
    %209 = vmatprep.subr.bf16.mxu0 0
    %210 = vmatpush1.bf16.msra.mxu0 0
    %211 = vmatprep.subr.bf16.mxu0 0
    %212 = vmatpush1.bf16.msra.mxu0 0
    %213 = vmatprep.mubr.bf16.mxu0 0
    %214 = vmatmul.mubr.bf16.gmra.mrb[0].mxu0 %v126
    %v215 = vpop.f32.mrb[0].mxu0
    %v216 = vadd.f32 %v131, %v215
    %v217 = vpop.f32.mrb[0].mxu0
    %v218 = vpop.f32.mrb[0].mxu0
    %v219 = vpop.f32.mrb[0].mxu0
    %220 = vdwg.mxu0
    %v221 = vmax.f32 %v216, 0.0
    %v222 = vld [vmem:[%s6] sm:$0xf]
    %v223 = vld [vmem:[%s6 + $0x4] sm:$0xf]
    %v224 = vld [vmem:[%s6 + $0x8] sm:$0xf]
    %v225 = vld [vmem:[%s6 + $0xc] sm:$0xf]
    %v226 = vld [vmem:[%s6 + $0x10] sm:$0xf]
    %v227 = vld [vmem:[%s6 + $0x14] sm:$0xf]
    %v228 = vld [vmem:[%s6 + $0x18] sm:$0xf]
    %v229 = vld [vmem:[%s6 + $0x1c] sm:$0xf]
    %v230 = vld [vmem:[%s6 + $0x20] sm:$0xf]
    %v231 = vld [vmem:[%s6 + $0x24] sm:$0xf]
    %v232 = vld [vmem:[%s6 + $0x28] sm:$0xf]
    %v233 = vld [vmem:[%s6 + $0x2c] sm:$0xf]
    %v234 = vld [vmem:[%s6 + $0x30] sm:$0xf]
    %v235 = vld [vmem:[%s6 + $0x34] sm:$0xf]
    %v236 = vld [vmem:[%s6 + $0x38] sm:$0xf]
    %v237 = vld [vmem:[%s6 + $0x3c] sm:$0xf]
    %v238 = vld [vmem:[%s7] sm:$0x1]
    %v239 = vpack.c.bf16 %v221, %v221
    %v241 = vlaneseq
    %v242 = vshrl.u32 %v241, 7
    %v243 = vsub.s32 0, %v242
    %v244 = vrot.slane %v238, %v243
    %v262 = vunpack.c.l.b16 %v222
    %v263 = vunpack.c.l.b16 %v223
    %v264 = vunpack.c.l.b16 %v224
    %v265 = vunpack.c.l.b16 %v225
    %v266 = vunpack.c.l.b16 %v226
    %v267 = vunpack.c.l.b16 %v227
    %v268 = vunpack.c.l.b16 %v228
    %v269 = vunpack.c.l.b16 %v229
    %v270 = vunpack.c.l.b16 %v230
    %v271 = vunpack.c.l.b16 %v231
    %v272 = vunpack.c.l.b16 %v232
    %v273 = vunpack.c.l.b16 %v233
    %v274 = vunpack.c.l.b16 %v234
    %v275 = vunpack.c.l.b16 %v235
    %v276 = vunpack.c.l.b16 %v236
    %v277 = vunpack.c.l.b16 %v237
    %v278 = vpack.c.b16 %v263, %v262
    %v279 = vpack.c.b16 %v265, %v264
    %v280 = vpack.c.b16 %v267, %v266
    %v281 = vpack.c.b16 %v269, %v268
    %v282 = vpack.c.b16 %v271, %v270
    %v283 = vpack.c.b16 %v273, %v272
    %v284 = vpack.c.b16 %v275, %v274
    %v285 = vpack.c.b16 %v277, %v276
    %294 = vmatprep.subr.bf16.mxu0 0
    %295 = vmatpush1.bf16.msra.mxu0 %v278
    %296 = vmatprep.subr.bf16.mxu0 0
    %297 = vmatpush1.bf16.msra.mxu0 %v279
    %298 = vmatprep.subr.bf16.mxu0 0
    %299 = vmatpush1.bf16.msra.mxu0 %v280
    %300 = vmatprep.subr.bf16.mxu0 0
    %301 = vmatpush1.bf16.msra.mxu0 %v281
    %302 = vmatprep.subr.bf16.mxu0 0
    %303 = vmatpush1.bf16.msra.mxu0 %v282
    %304 = vmatprep.subr.bf16.mxu0 0
    %305 = vmatpush1.bf16.msra.mxu0 %v283
    %306 = vmatprep.subr.bf16.mxu0 0
    %307 = vmatpush1.bf16.msra.mxu0 %v284
    %308 = vmatprep.subr.bf16.mxu0 0
    %309 = vmatpush1.bf16.msra.mxu0 %v285
    %310 = vmatprep.subr.bf16.mxu0 0
    %311 = vmatpush1.bf16.msra.mxu0 0
    %312 = vmatprep.subr.bf16.mxu0 0
    %313 = vmatpush1.bf16.msra.mxu0 0
    %314 = vmatprep.subr.bf16.mxu0 0
    %315 = vmatpush1.bf16.msra.mxu0 0
    %316 = vmatprep.subr.bf16.mxu0 0
    %317 = vmatpush1.bf16.msra.mxu0 0
    %318 = vmatprep.subr.bf16.mxu0 0
    %319 = vmatpush1.bf16.msra.mxu0 0
    %320 = vmatprep.subr.bf16.mxu0 0
    %321 = vmatpush1.bf16.msra.mxu0 0
    %322 = vmatprep.subr.bf16.mxu0 0
    %323 = vmatpush1.bf16.msra.mxu0 0
    %324 = vmatprep.subr.bf16.mxu0 0
    %325 = vmatpush1.bf16.msra.mxu0 0
    %326 = vmatprep.mubr.bf16.mxu0 0
    %327 = vmatmul.mubr.bf16.gmra.mrb[0].mxu0 %v239
    %v328 = vpop.f32.mrb[0].mxu0
    %v329 = vadd.f32 %v244, %v328
    %v330 = vpop.f32.mrb[0].mxu0
    %v331 = vpop.f32.mrb[0].mxu0
    %v332 = vpop.f32.mrb[0].mxu0
    %333 = vdwg.mxu0
    %vm334 = vcmask 64512
    %335 = vst.msk [vmem:[#allocation5] sm:$0xff] %vm334, %v329
    // Predicated region
    $region38: #{tpu_custom_call.1} parent=1 // pred_check
      _
    $region39: #{tpu_custom_call.1} parent=1 // pred_check_branch
      %337 = sbr.rel (0) target = $region41
    $region40: #{tpu_custom_call.1} parent=1 // pred_region
      %s339 = ssub.s32 128, 128
      %340 = vsyncadd [#allocation4], %s339
      %s342 = sshll.u32 [#allocation5], 4
      %s343 = int_to_ptr.vmem [resolvable:$true] %s342
      %345 = dma.vmem_to_hbm [thread:$0]  %s343, 128, %s8, [#allocation4]
    $region41: #{tpu_custom_call.1} parent=1 // pred_fallthru
      _
    // Predicated region
    $region42: #{tpu_custom_call.1} parent=1 // pred_check
      _
    $region43: #{tpu_custom_call.1} parent=1 // pred_check_branch
      %347 = sbr.rel (0) target = $region45
    $region44: #{tpu_custom_call.1} parent=1 // pred_region
      %348 = dma.done [#allocation4], 128
    $region45: #{tpu_custom_call.1} parent=1 // pred_fallthru
      _
    %349 = vsyncpa [#allocation3], 1
    %350 = vsyncpa [#allocation4], 1

// kernel: tpu_custom_call.1
$region0: #{tpu_custom_call.1}
  #allocation0 [shape = 'u32[]', space=smem, size = 0x4, offset = 0x4, fixed_abs, tag = 'smem constant byte address 0x4 - core index']
  #allocation1 [shape = 'u32[144,128]{1,0:T(1,128)}', space=vmem, size = 0x12000, scoped, tag = 'internal scratch']
  %s0 = inlined_call_operand.vmem [shape: f32[8,16], index: 0, kind: input, shape index: {}]
  %s1 = inlined_call_operand.vmem [shape: f32[8,16], index: 1, kind: input, shape index: {}]
  %s2 = inlined_call_operand.hbm [shape: bf16[16,128], index: 2, kind: input, shape index: {}]
  %s3 = inlined_call_operand.vmem [shape: f32[1,128], index: 3, kind: input, shape index: {}]
  %s4 = inlined_call_operand.vmem [shape: bf16[128,128], index: 4, kind: input, shape index: {}]
  %s5 = inlined_call_operand.vmem [shape: f32[1,128], index: 5, kind: input, shape index: {}]
  %s6 = inlined_call_operand.vmem [shape: bf16[128,8], index: 6, kind: input, shape index: {}]
  %s7 = inlined_call_operand.vmem [shape: f32[1,8], index: 7, kind: input, shape index: {}]
  %s8 = inlined_call_operand.hbm [shape: f32[8,8], index: 8, kind: output, shape index: {}]
  %s9 = sld [smem:[#allocation0]]
  $region46: #{tpu_custom_call.1} parent=0
    _
  %s11 = ssub.s32 1, %s9
  %s12 = scalar_select 0, %s11, %s9
  $region1: #{tpu_custom_call.1} parent=0
    #allocation2 [shape = 'u8[4096]{0}', space=vmem, size = 0x1000, scoped, tag = 'input window, operand 2, single buffered']
    #allocation3 [shape = 's32[1]{0}', space=sflag, size = 0x4, scoped, tag = 'scoped memory for tpu_custom_call.1']
    #allocation4 [shape = 's32[1]{0}', space=sflag, size = 0x4, scoped, tag = 'scoped memory for tpu_custom_call.1']
    #allocation5 [shape = 'u8[4096]{0}', space=vmem, size = 0x1000, scoped, tag = 'output window, operand 0, single buffered']
    %13 = vsyncpa [#allocation3], 0
    %14 = vsyncpa [#allocation4], 0
    // Predicated region
    $region2: #{tpu_custom_call.1} parent=1 // pred_check
      _
    $region3: #{tpu_custom_call.1} parent=1 // pred_check_branch
      %16 = sbr.rel (0) target = $region5
    $region4: #{tpu_custom_call.1} parent=1 // pred_region
      _
    $region5: #{tpu_custom_call.1} parent=1 // pred_fallthru
      _
    // Predicated region
    $region6: #{tpu_custom_call.1} parent=1 // pred_check
      _
    $region7: #{tpu_custom_call.1} parent=1 // pred_check_branch
      %18 = sbr.rel (0) target = $region9
    $region8: #{tpu_custom_call.1} parent=1 // pred_region
      _
    $region9: #{tpu_custom_call.1} parent=1 // pred_fallthru
      _
    // Predicated region
    $region10: #{tpu_custom_call.1} parent=1 // pred_check
      _
    $region11: #{tpu_custom_call.1} parent=1 // pred_check_branch
      %20 = sbr.rel (0) target = $region13
    $region12: #{tpu_custom_call.1} parent=1 // pred_region
      %s22 = ssub.s32 128, 128
      %23 = vsyncadd [#allocation3], %s22
      %s24 = sshll.u32 [#allocation2], 4
      %s25 = int_to_ptr.vmem [resolvable:$true] %s24
      %30 = dma.hbm_to_vmem [thread:$0]  %s2, 128, %s25, [#allocation3], 64, 64, 4
    $region13: #{tpu_custom_call.1} parent=1 // pred_fallthru
      _
    // Predicated region
    $region14: #{tpu_custom_call.1} parent=1 // pred_check
      _
    $region15: #{tpu_custom_call.1} parent=1 // pred_check_branch
      %32 = sbr.rel (0) target = $region17
    $region16: #{tpu_custom_call.1} parent=1 // pred_region
      _
    $region17: #{tpu_custom_call.1} parent=1 // pred_fallthru
      _
    // Predicated region
    $region18: #{tpu_custom_call.1} parent=1 // pred_check
      _
    $region19: #{tpu_custom_call.1} parent=1 // pred_check_branch
      %34 = sbr.rel (0) target = $region21
    $region20: #{tpu_custom_call.1} parent=1 // pred_region
      _
    $region21: #{tpu_custom_call.1} parent=1 // pred_fallthru
      _
    // Predicated region
    $region22: #{tpu_custom_call.1} parent=1 // pred_check
      _
    $region23: #{tpu_custom_call.1} parent=1 // pred_check_branch
      %36 = sbr.rel (0) target = $region25
    $region24: #{tpu_custom_call.1} parent=1 // pred_region
      _
    $region25: #{tpu_custom_call.1} parent=1 // pred_fallthru
      _
    // Predicated region
    $region26: #{tpu_custom_call.1} parent=1 // pred_check
      _
    $region27: #{tpu_custom_call.1} parent=1 // pred_check_branch
      %38 = sbr.rel (0) target = $region29
    $region28: #{tpu_custom_call.1} parent=1 // pred_region
      _
    $region29: #{tpu_custom_call.1} parent=1 // pred_fallthru
      _
    // Predicated region
    $region30: #{tpu_custom_call.1} parent=1 // pred_check
      _
    $region31: #{tpu_custom_call.1} parent=1 // pred_check_branch
      %40 = sbr.rel (0) target = $region33
    $region32: #{tpu_custom_call.1} parent=1 // pred_region
      _
    $region33: #{tpu_custom_call.1} parent=1 // pred_fallthru
      _
    // Predicated region
    $region34: #{tpu_custom_call.1} parent=1 // pred_check
      _
    $region35: #{tpu_custom_call.1} parent=1 // pred_check_branch
      %42 = sbr.rel (0) target = $region37
    $region36: #{tpu_custom_call.1} parent=1 // pred_region
      %43 = dma.done [#allocation3], 128
    $region37: #{tpu_custom_call.1} parent=1 // pred_fallthru
      _
    %v45 = vld [vmem:[%s0] sm:$0xff]
    %v46 = vld [vmem:[%s1] sm:$0xff]
    %v47 = vmul.f32 %v45, %v46
    %v48 = vld [vmem:[#allocation2] sm:$0xf]
    %v49 = vld [vmem:[#allocation2 + $0x4] sm:$0xf]
    %v50 = vld [vmem:[%s3] sm:$0x1]
    %v51 = vpack.c.bf16 %v47, %v47
    %v53 = vlaneseq
    %v54 = vshrl.u32 %v53, 7
    %v55 = vsub.s32 0, %v54
    %v56 = vrot.slane %v50, %v55
    %v60 = vunpack.c.l.b16 %v48
    %v61 = vunpack.c.l.b16 %v49
    %v62 = vpack.c.b16 %v61, %v60
    %vm64 = vcmask 130048
    %v66 = vsel %vm64, %v51, 0
    %68 = vmatprep.subr.bf16.mxu0 0
    %69 = vmatpush1.bf16.msra.mxu0 %v62
    %70 = vmatprep.subr.bf16.mxu0 0
    %71 = vmatpush1.bf16.msra.mxu0 0
    %72 = vmatprep.subr.bf16.mxu0 0
    %73 = vmatpush1.bf16.msra.mxu0 0
    %74 = vmatprep.subr.bf16.mxu0 0
    %75 = vmatpush1.bf16.msra.mxu0 0
    %76 = vmatprep.subr.bf16.mxu0 0
    %77 = vmatpush1.bf16.msra.mxu0 0
    %78 = vmatprep.subr.bf16.mxu0 0
    %79 = vmatpush1.bf16.msra.mxu0 0
    %80 = vmatprep.subr.bf16.mxu0 0
    %81 = vmatpush1.bf16.msra.mxu0 0
    %82 = vmatprep.subr.bf16.mxu0 0
    %83 = vmatpush1.bf16.msra.mxu0 0
    %84 = vmatprep.subr.bf16.mxu0 0
    %85 = vmatpush1.bf16.msra.mxu0 0
    %86 = vmatprep.subr.bf16.mxu0 0
    %87 = vmatpush1.bf16.msra.mxu0 0
    %88 = vmatprep.subr.bf16.mxu0 0
    %89 = vmatpush1.bf16.msra.mxu0 0
    %90 = vmatprep.subr.bf16.mxu0 0
    %91 = vmatpush1.bf16.msra.mxu0 0
    %92 = vmatprep.subr.bf16.mxu0 0
    %93 = vmatpush1.bf16.msra.mxu0 0
    %94 = vmatprep.subr.bf16.mxu0 0
    %95 = vmatpush1.bf16.msra.mxu0 0
    %96 = vmatprep.subr.bf16.mxu0 0
    %97 = vmatpush1.bf16.msra.mxu0 0
    %98 = vmatprep.subr.bf16.mxu0 0
    %99 = vmatpush1.bf16.msra.mxu0 0
    %100 = vmatprep.mubr.bf16.mxu0 0
    %101 = vmatmul.mubr.bf16.gmra.mrb[0].mxu0 %v66
    %v102 = vpop.f32.mrb[0].mxu0
    %v103 = vadd.f32 %v56, %v102
    %v104 = vpop.f32.mrb[0].mxu0
    %v105 = vpop.f32.mrb[0].mxu0
    %v106 = vpop.f32.mrb[0].mxu0
    %107 = vdwg.mxu0
    %v108 = vmax.f32 %v103, 0.0
    %v109 = vld [vmem:[%s4] sm:$0xf]
    %v110 = vld [vmem:[%s4 + $0x4] sm:$0xf]
    %v111 = vld [vmem:[%s4 + $0x8] sm:$0xf]
    %v112 = vld [vmem:[%s4 + $0xc] sm:$0xf]
    %v113 = vld [vmem:[%s4 + $0x10] sm:$0xf]
    %v114 = vld [vmem:[%s4 + $0x14] sm:$0xf]
    %v115 = vld [vmem:[%s4 + $0x18] sm:$0xf]
    %v116 = vld [vmem:[%s4 + $0x1c] sm:$0xf]
    %v117 = vld [vmem:[%s4 + $0x20] sm:$0xf]
    %v118 = vld [vmem:[%s4 + $0x24] sm:$0xf]
    %v119 = vld [vmem:[%s4 + $0x28] sm:$0xf]
    %v120 = vld [vmem:[%s4 + $0x2c] sm:$0xf]
    %v121 = vld [vmem:[%s4 + $0x30] sm:$0xf]
    %v122 = vld [vmem:[%s4 + $0x34] sm:$0xf]
    %v123 = vld [vmem:[%s4 + $0x38] sm:$0xf]
    %v124 = vld [vmem:[%s4 + $0x3c] sm:$0xf]
    %v125 = vld [vmem:[%s5] sm:$0x1]
    %v126 = vpack.c.bf16 %v108, %v108
    %v128 = vlaneseq
    %v129 = vshrl.u32 %v128, 7
    %v130 = vsub.s32 0, %v129
    %v131 = vrot.slane %v125, %v130
    %v149 = vunpack.c.l.b16 %v109
    %v150 = vunpack.c.l.b16 %v110
    %v151 = vunpack.c.l.b16 %v111
    %v152 = vunpack.c.l.b16 %v112
    %v153 = vunpack.c.l.b16 %v113
    %v154 = vunpack.c.l.b16 %v114
    %v155 = vunpack.c.l.b16 %v115
    %v156 = vunpack.c.l.b16 %v116
    %v157 = vunpack.c.l.b16 %v117
    %v158 = vunpack.c.l.b16 %v118
    %v159 = vunpack.c.l.b16 %v119
    %v160 = vunpack.c.l.b16 %v120
    %v161 = vunpack.c.l.b16 %v121
    %v162 = vunpack.c.l.b16 %v122
    %v163 = vunpack.c.l.b16 %v123
    %v164 = vunpack.c.l.b16 %v124
    %v165 = vpack.c.b16 %v150, %v149
    %v166 = vpack.c.b16 %v152, %v151
    %v167 = vpack.c.b16 %v154, %v153
    %v168 = vpack.c.b16 %v156, %v155
    %v169 = vpack.c.b16 %v158, %v157
    %v170 = vpack.c.b16 %v160, %v159
    %v171 = vpack.c.b16 %v162, %v161
    %v172 = vpack.c.b16 %v164, %v163
    %181 = vmatprep.subr.bf16.mxu0 0
    %182 = vmatpush1.bf16.msra.mxu0 %v165
    %183 = vmatprep.subr.bf16.mxu0 0
    %184 = vmatpush1.bf16.msra.mxu0 %v166
    %185 = vmatprep.subr.bf16.mxu0 0
    %186 = vmatpush1.bf16.msra.mxu0 %v167
    %187 = vmatprep.subr.bf16.mxu0 0
    %188 = vmatpush1.bf16.msra.mxu0 %v168
    %189 = vmatprep.subr.bf16.mxu0 0
    %190 = vmatpush1.bf16.msra.mxu0 %v169
    %191 = vmatprep.subr.bf16.mxu0 0
    %192 = vmatpush1.bf16.msra.mxu0 %v170
    %193 = vmatprep.subr.bf16.mxu0 0
    %194 = vmatpush1.bf16.msra.mxu0 %v171
    %195 = vmatprep.subr.bf16.mxu0 0
    %196 = vmatpush1.bf16.msra.mxu0 %v172
    %197 = vmatprep.subr.bf16.mxu0 0
    %198 = vmatpush1.bf16.msra.mxu0 0
    %199 = vmatprep.subr.bf16.mxu0 0
    %200 = vmatpush1.bf16.msra.mxu0 0
    %201 = vmatprep.subr.bf16.mxu0 0
    %202 = vmatpush1.bf16.msra.mxu0 0
    %203 = vmatprep.subr.bf16.mxu0 0
    %204 = vmatpush1.bf16.msra.mxu0 0
    %205 = vmatprep.subr.bf16.mxu0 0
    %206 = vmatpush1.bf16.msra.mxu0 0
    %207 = vmatprep.subr.bf16.mxu0 0
    %208 = vmatpush1.bf16.msra.mxu0 0
    %209 = vmatprep.subr.bf16.mxu0 0
    %210 = vmatpush1.bf16.msra.mxu0 0
    %211 = vmatprep.subr.bf16.mxu0 0
    %212 = vmatpush1.bf16.msra.mxu0 0
    %213 = vmatprep.mubr.bf16.mxu0 0
    %214 = vmatmul.mubr.bf16.gmra.mrb[0].mxu0 %v126
    %v215 = vpop.f32.mrb[0].mxu0
    %v216 = vadd.f32 %v131, %v215
    %v217 = vpop.f32.mrb[0].mxu0
    %v218 = vpop.f32.mrb[0].mxu0
    %v219 = vpop.f32.mrb[0].mxu0
    %220 = vdwg.mxu0
    %v221 = vmax.f32 %v216, 0.0
    %v222 = vld [vmem:[%s6] sm:$0xf]
    %v223 = vld [vmem:[%s6 + $0x4] sm:$0xf]
    %v224 = vld [vmem:[%s6 + $0x8] sm:$0xf]
    %v225 = vld [vmem:[%s6 + $0xc] sm:$0xf]
    %v226 = vld [vmem:[%s6 + $0x10] sm:$0xf]
    %v227 = vld [vmem:[%s6 + $0x14] sm:$0xf]
    %v228 = vld [vmem:[%s6 + $0x18] sm:$0xf]
    %v229 = vld [vmem:[%s6 + $0x1c] sm:$0xf]
    %v230 = vld [vmem:[%s6 + $0x20] sm:$0xf]
    %v231 = vld [vmem:[%s6 + $0x24] sm:$0xf]
    %v232 = vld [vmem:[%s6 + $0x28] sm:$0xf]
    %v233 = vld [vmem:[%s6 + $0x2c] sm:$0xf]
    %v234 = vld [vmem:[%s6 + $0x30] sm:$0xf]
    %v235 = vld [vmem:[%s6 + $0x34] sm:$0xf]
    %v236 = vld [vmem:[%s6 + $0x38] sm:$0xf]
    %v237 = vld [vmem:[%s6 + $0x3c] sm:$0xf]
    %v238 = vld [vmem:[%s7] sm:$0x1]
    %v239 = vpack.c.bf16 %v221, %v221
    %v241 = vlaneseq
    %v242 = vshrl.u32 %v241, 7
    %v243 = vsub.s32 0, %v242
    %v244 = vrot.slane %v238, %v243
    %v262 = vunpack.c.l.b16 %v222
    %v263 = vunpack.c.l.b16 %v223
    %v264 = vunpack.c.l.b16 %v224
    %v265 = vunpack.c.l.b16 %v225
    %v266 = vunpack.c.l.b16 %v226
    %v267 = vunpack.c.l.b16 %v227
    %v268 = vunpack.c.l.b16 %v228
    %v269 = vunpack.c.l.b16 %v229
    %v270 = vunpack.c.l.b16 %v230
    %v271 = vunpack.c.l.b16 %v231
    %v272 = vunpack.c.l.b16 %v232
    %v273 = vunpack.c.l.b16 %v233
    %v274 = vunpack.c.l.b16 %v234
    %v275 = vunpack.c.l.b16 %v235
    %v276 = vunpack.c.l.b16 %v236
    %v277 = vunpack.c.l.b16 %v237
    %v278 = vpack.c.b16 %v263, %v262
    %v279 = vpack.c.b16 %v265, %v264
    %v280 = vpack.c.b16 %v267, %v266
    %v281 = vpack.c.b16 %v269, %v268
    %v282 = vpack.c.b16 %v271, %v270
    %v283 = vpack.c.b16 %v273, %v272
    %v284 = vpack.c.b16 %v275, %v274
    %v285 = vpack.c.b16 %v277, %v276
    %294 = vmatprep.subr.bf16.mxu0 0
    %295 = vmatpush1.bf16.msra.mxu0 %v278
    %296 = vmatprep.subr.bf16.mxu0 0
    %297 = vmatpush1.bf16.msra.mxu0 %v279
    %298 = vmatprep.subr.bf16.mxu0 0
    %299 = vmatpush1.bf16.msra.mxu0 %v280
    %300 = vmatprep.subr.bf16.mxu0 0
    %301 = vmatpush1.bf16.msra.mxu0 %v281
    %302 = vmatprep.subr.bf16.mxu0 0
    %303 = vmatpush1.bf16.msra.mxu0 %v282
    %304 = vmatprep.subr.bf16.mxu0 0
    %305 = vmatpush1.bf16.msra.mxu0 %v283
    %306 = vmatprep.subr.bf16.mxu0 0
    %307 = vmatpush1.bf16.msra.mxu0 %v284
    %308 = vmatprep.subr.bf16.mxu0 0
    %309 = vmatpush1.bf16.msra.mxu0 %v285
    %310 = vmatprep.subr.bf16.mxu0 0
    %311 = vmatpush1.bf16.msra.mxu0 0
    %312 = vmatprep.subr.bf16.mxu0 0
    %313 = vmatpush1.bf16.msra.mxu0 0
    %314 = vmatprep.subr.bf16.mxu0 0
    %315 = vmatpush1.bf16.msra.mxu0 0
    %316 = vmatprep.subr.bf16.mxu0 0
    %317 = vmatpush1.bf16.msra.mxu0 0
    %318 = vmatprep.subr.bf16.mxu0 0
    %319 = vmatpush1.bf16.msra.mxu0 0
    %320 = vmatprep.subr.bf16.mxu0 0
    %321 = vmatpush1.bf16.msra.mxu0 0
    %322 = vmatprep.subr.bf16.mxu0 0
    %323 = vmatpush1.bf16.msra.mxu0 0
    %324 = vmatprep.subr.bf16.mxu0 0
    %325 = vmatpush1.bf16.msra.mxu0 0
    %326 = vmatprep.mubr.bf16.mxu0 0
    %327 = vmatmul.mubr.bf16.gmra.mrb[0].mxu0 %v239
    %v328 = vpop.f32.mrb[0].mxu0
    %v329 = vadd.f32 %v244, %v328
    %v330 = vpop.f32.mrb[0].mxu0
    %v331 = vpop.f32.mrb[0].mxu0
    %v332 = vpop.f32.mrb[0].mxu0
    %333 = vdwg.mxu0
    %vm334 = vcmask 64512
    %335 = vst.msk [vmem:[#allocation5] sm:$0xff] %vm334, %v329
    // Predicated region
    $region38: #{tpu_custom_call.1} parent=1 // pred_check
      _
    $region39: #{tpu_custom_call.1} parent=1 // pred_check_branch
      %337 = sbr.rel (0) target = $region41
    $region40: #{tpu_custom_call.1} parent=1 // pred_region
      %s339 = ssub.s32 128, 128
      %340 = vsyncadd [#allocation4], %s339
      %s342 = sshll.u32 [#allocation5], 4
      %s343 = int_to_ptr.vmem [resolvable:$true] %s342
      %345 = dma.vmem_to_hbm [thread:$0]  %s343, 128, %s8, [#allocation4]
    $region41: #{tpu_custom_call.1} parent=1 // pred_fallthru
      _
    // Predicated region
    $region42: #{tpu_custom_call.1} parent=1 // pred_check
      _
    $region43: #{tpu_custom_call.1} parent=1 // pred_check_branch
      %347 = sbr.rel (0) target = $region45
    $region44: #{tpu_custom_call.1} parent=1 // pred_region
      %348 = dma.done [#allocation4], 128
    $region45: #{tpu_custom_call.1} parent=1 // pred_fallthru
      _
    %349 = vsyncpa [#allocation3], 1
    %350 = vsyncpa [#allocation4], 1

</llo_original>
